<compile_context>
chip_gen: v6e
topology: v6e:2x2x1
jax: 0.10.0
libtpu: 0.0.40
codegen_flags: <defaults>
</compile_context>

<pallas_src>
import functools
import numpy as np
import jax
import jax.numpy as jnp
from jax.experimental import pallas as pl
from jax.experimental.pallas import tpu as pltpu


# --------------------------------------------------------------------------- #
# Kernel: one tree level per grid step.
# --------------------------------------------------------------------------- #
def _up_rvnn_kernel(xg_ref, v_ref, cidx_ref,      # per-level slabs (VMEM)
                    wh_ref, bh_ref,               # constants (VMEM, constant index)
                    nodes_ref,                    # output: (R, Hp) hidden table (resident)
                    *, L, C, Hp, R):
    l = pl.program_id(0)

    @pl.when(l == 0)
    def _init():
        # Zero the whole table: rows >= num_levels*L act as the all-zero "padded
        # child" rows (read but never written).
        nodes_ref[...] = jnp.zeros(nodes_ref.shape, nodes_ref.dtype)

    # ---- one-hot MXU gather of children hidden rows (child-slot-major) ----------
    # Row s = c*L + j holds node-slot j's c-th child index (pad -> all-zero row).
    idx = cidx_ref[0]                                                    # (C*L, 1) i32
    iota = jax.lax.broadcasted_iota(jnp.int32, (C * L, R), 1)
    onehot = (iota == idx).astype(jnp.float32)                           # (C*L, R)
    childs = jnp.dot(onehot, nodes_ref[...],
                     preferred_element_type=jnp.float32)                 # (C*L, Hp)

    # ---- sigmoid attention + weighted sum over each node's C child slots --------
    # score[j, c] = childs[c,j,:] . v[j,:]   where v = (p W_k) W_q^T (precomputed).
    v = v_ref[0]                                                         # (L, Hp)
    ctx = jnp.zeros((L, Hp), jnp.float32)
    for c in range(C):                                                   # C small & static
        ch = childs[c * L:(c + 1) * L, :]                                # (L, Hp)
        w = jax.nn.sigmoid(jnp.sum(ch * v, axis=-1, keepdims=True))      # (L, 1)
        ctx = ctx + w * ch

    # ---- GRUCell(input = p_embed, hidden = ctx) --------------------------------
    # Input-side gates xg = p @ [W_ir|W_iz|W_in] + b_i* precomputed in the wrapper.
    xg = xg_ref[0]                                                       # (L, 3Hp)
    hg = jnp.dot(ctx, wh_ref[...],
                 preferred_element_type=jnp.float32) + bh_ref[...]       # (L, 3Hp)
    r = jax.nn.sigmoid(xg[:, 0:Hp] + hg[:, 0:Hp])
    z = jax.nn.sigmoid(xg[:, Hp:2 * Hp] + hg[:, Hp:2 * Hp])
    n = jnp.tanh(xg[:, 2 * Hp:3 * Hp] + r * hg[:, 2 * Hp:3 * Hp])
    h_new = (1.0 - z) * n + z * ctx                                      # (L, Hp)

    # ---- contiguous, aligned write-back of this level's rows --------------------
    row0 = pl.multiple_of(l * L, 8)                                      # L % 8 == 0
    nodes_ref[pl.ds(row0, L), :] = h_new


# --------------------------------------------------------------------------- #
# Host-side schedule: flatten the data-dependent traversal into static levels,
# renumbering nodes by (level, slot) so writes are level-contiguous.
# --------------------------------------------------------------------------- #
def build_schedule(child_lists, is_root):
    N = len(child_lists)
    C = max(1, max((len(ch) for ch in child_lists), default=0))

    # Depth of each node: leaves = 0, else 1 + max(child depth).
    depth = [-1] * N
    remaining = set(range(N))
    while remaining:
        progressed = False
        for i in list(remaining):
            ch = child_lists[i]
            if all(depth[c] >= 0 for c in ch):
                depth[i] = 0 if not ch else 1 + max(depth[c] for c in ch)
                remaining.discard(i)
                progressed = True
        if not progressed:
            raise ValueError("child_lists contains a cycle")
    num_levels = max(depth) + 1
    levels = [[] for _ in range(num_levels)]
    for i, d in enumerate(depth):
        levels[d].append(i)

    L = max(len(lv) for lv in levels)
    L = max(8, -(-L // 8) * 8)                 # level width padded to 8 sublanes
    R = -(-(num_levels * L + 1) // 128) * 128  # table rows padded to 128 (incl. zero rows)
    ZERO_ROW = num_levels * L                  # never written; stays 0 after init

    # New (level-major) node ids.
    new_id = {}
    for d, lv in enumerate(levels):
        for j, node in enumerate(lv):
            new_id[node] = d * L + j

    # Gather index into the wrapper's node-ordered arrays (index N = appended zero row).
    gather_idx = np.full(num_levels * L, N, dtype=np.int32)
    for d, lv in enumerate(levels):
        for j, node in enumerate(lv):
            gather_idx[d * L + j] = node

    # Child table, child-slot-major: row c*L + j = node-slot j's c-th child (new id).
    child = np.full((num_levels, C * L, 1), ZERO_ROW, dtype=np.int32)
    for d, lv in enumerate(levels):
        for j, node in enumerate(lv):
            for c, ch in enumerate(child_lists[node]):
                child[d, c * L + j, 0] = new_id[ch]

    root_rows = np.array([new_id[i] for i in range(N) if is_root[i]], dtype=np.int32)
    if root_rows.size == 0:
        raise ValueError("tree has no root node")

    return dict(N=N, L=L, C=C, R=R, num_levels=num_levels,
                gather_idx=gather_idx, child=child, root_rows=root_rows)


# --------------------------------------------------------------------------- #
# Forward wrapper.
# --------------------------------------------------------------------------- #
def up_rvnn_forward(embeddings, schedule, params):
    """embeddings: (N, 1, node_dim) f32.  Returns (H,) = elementwise max over roots."""
    N, L, C, R = schedule["N"], schedule["L"], schedule["C"], schedule["R"]
    num_levels = schedule["num_levels"]
    node_dim = embeddings.shape[-1]
    H = params["W_proj"].shape[1]
    Hp = max(128, -(-H // 128) * 128)          # lane-padded hidden width

    # ---- hoisted, tree-independent batched matmuls (full-M MXU work, once) ----
    emb2d = embeddings.reshape(N, node_dim).astype(jnp.float32)
    p_all = emb2d @ params["W_proj"] + params["b_proj"]                    # (N, H)
    # Folded attention key: score(child) = child . v with v = (p W_k) W_q^T.
    v_all = (p_all @ params["W_k"]) @ params["W_q"].T                      # (N, H)
    xg_r = p_all @ params["W_ir"] + params["b_ir"]
    xg_z = p_all @ params["W_iz"] + params["b_iz"]
    xg_n = p_all @ params["W_in"] + params["b_in"]

    def pad_lanes(a):
        return jnp.pad(a, ((0, 0), (0, Hp - a.shape[1])))

    def pad_w(w):                                                          # (H,H)->(Hp,Hp)
        return jnp.pad(w, ((0, Hp - w.shape[0]), (0, Hp - w.shape[1])))

    xg_all = jnp.concatenate([pad_lanes(xg_r), pad_lanes(xg_z), pad_lanes(xg_n)], axis=1)
    v_all_p = pad_lanes(v_all)                                             # (N, Hp)
    wh_f = jnp.concatenate([pad_w(params["W_hr"]), pad_w(params["W_hz"]),
                            pad_w(params["W_hn"])], axis=1)                # (Hp, 3Hp)
    bh_f = jnp.concatenate([pad_lanes(params["b_hr"]), pad_lanes(params["b_hz"]),
                            pad_lanes(params["b_hn"])], axis=1)            # (1, 3Hp)

    # Reorder into padded level slabs (pad slots -> appended zero row at index N).
    gidx = jnp.asarray(schedule["gather_idx"])                             # (levels*L,)
    ext = lambda a: jnp.concatenate([a, jnp.zeros((1, a.shape[1]), a.dtype)], axis=0)
    xg_sched = jnp.take(ext(xg_all), gidx, axis=0).reshape(num_levels, L, 3 * Hp)
    v_sched = jnp.take(ext(v_all_p), gidx, axis=0).reshape(num_levels, L, Hp)
    child_idx = jnp.asarray(schedule["child"])                             # (levels, C*L, 1)

    kernel = functools.partial(_up_rvnn_kernel, L=L, C=C, Hp=Hp, R=R)

    # Capacity-aware VMEM budget: resident table + double-buffered level slabs
    # + single-buffered constants + in-kernel temporaries, clamped to the chip.
    per_level = 4 * (L * 3 * Hp + L * Hp + C * L)
    const_in = 4 * (Hp * 3 * Hp + 3 * Hp)
    table = 4 * (R * Hp)
    temps = 4 * (C * L * R + 2 * C * L * Hp + 12 * L * Hp)
    need = 2 * per_level + const_in + 2 * table + temps
    try:
        vmem_cap = int(pltpu.get_tpu_info().vmem_capacity_bytes)
    except Exception:
        vmem_cap = 64 << 20                                                # v7x per-TC
    vmem_limit = int(min(max(need + (4 << 20), 16 << 20), int(vmem_cap * 0.8)))

    grid_spec = pltpu.PrefetchScalarGridSpec(
        num_scalar_prefetch=0,
        grid=(num_levels,),
        in_specs=[
            pl.BlockSpec((1, L, 3 * Hp), lambda l: (l, 0, 0)),   # fused input gates
            pl.BlockSpec((1, L, Hp), lambda l: (l, 0, 0)),       # folded attention key v
            pl.BlockSpec((1, C * L, 1), lambda l: (l, 0, 0)),    # child indices (new ids)
            pl.BlockSpec((Hp, 3 * Hp), lambda l: (0, 0)),        # fused hidden-side W
            pl.BlockSpec((1, 3 * Hp), lambda l: (0, 0)),         # fused hidden-side b
        ],
        # Whole hidden table as a resident (constant-index) accumulator output.
        out_specs=pl.BlockSpec((R, Hp), lambda l: (0, 0)),
    )

    table_out = pl.pallas_call(
        kernel,
        out_shape=jax.ShapeDtypeStruct((R, Hp), jnp.float32),
        grid_spec=grid_spec,
        compiler_params=pltpu.CompilerParams(
            dimension_semantics=("arbitrary",),   # levels are sequential (dep via table)
            vmem_limit_bytes=vmem_limit),
    )(xg_sched, v_sched, child_idx, wh_f, bh_f)

    # Root max in the wrapper over the exported, level-ordered hidden table.
    root_rows = jnp.asarray(schedule["root_rows"])
    root_h = jnp.take(table_out[:, :H], root_rows, axis=0)                 # (n_roots, H)
    return jnp.max(root_h, axis=0)                                         # (H,)


# --------------------------------------------------------------------------- #
# Params + pure-JAX reference (for verification).
# --------------------------------------------------------------------------- #
def init_params(key, node_dim, H, A):
    ks = jax.random.split(key, 16)
    s = 0.2
    p = {
        "W_proj": jax.random.normal(ks[0], (node_dim, H), jnp.float32) * s,
        "b_proj": jax.random.normal(ks[1], (1, H), jnp.float32) * s,
        "W_q": jax.random.normal(ks[2], (H, A), jnp.float32) * s,
        "W_k": jax.random.normal(ks[3], (H, A), jnp.float32) * s,
    }
    for j, nm in enumerate(["ir", "iz", "in", "hr", "hz", "hn"]):
        p["W_" + nm] = jax.random.normal(ks[4 + j], (H, H), jnp.float32) * s
        p["b_" + nm] = jax.random.normal(ks[10 + j], (1, H), jnp.float32) * s
    return p


def reference(embeddings, child_lists, is_root, params):
    """Pure-JAX replica of Up_RvNN.forward (node-by-node)."""
    N = embeddings.shape[0]
    H = params["W_proj"].shape[1]
    nodes_h = {}
    root_rows = []
    for i in range(N):
        p = embeddings[i] @ params["W_proj"] + params["b_proj"]            # (1, H)
        ch = child_lists[i]
        if len(ch) == 0:
            childs = jnp.zeros((1, H), jnp.float32)
        else:
            childs = jnp.concatenate([nodes_h[c] for c in ch], axis=0)
        q = childs @ params["W_q"]
        k = p @ params["W_k"]
        w = jax.nn.sigmoid(q @ k.T)                                        # (C, 1)
        ctx = w.T @ childs                                                 # (1, H)
        x, h = p, ctx
        r = jax.nn.sigmoid(x @ params["W_ir"] + params["b_ir"] + h @ params["W_hr"] + params["b_hr"])
        z = jax.nn.sigmoid(x @ params["W_iz"] + params["b_iz"] + h @ params["W_hz"] + params["b_hz"])
        n = jnp.tanh(x @ params["W_in"] + params["b_in"] + r * (h @ params["W_hn"] + params["b_hn"]))
        h_new = (1.0 - z) * n + z * h
        nodes_h[i] = h_new
        if is_root[i]:
            root_rows.append(h_new)
    return jnp.max(jnp.concatenate(root_rows, axis=0), axis=0)


if __name__ == "__main__":
    # Small deterministic example: 8-node tree.
    #   leaves: 0,1,2,3 ; 4<-[0,1] ; 5<-[2,3] ; 6<-[4,5] ; root 7<-[6]
    N = 8
    node_dim, hidden_dim, attn_dim = 32, 32, 16
    child_lists = [[], [], [], [], [0, 1], [2, 3], [4, 5], [6]]
    is_root_py = [0, 0, 0, 0, 0, 0, 0, 1]

    key = jax.random.PRNGKey(0)
    k_emb, k_par = jax.random.split(key)
    embeddings = jax.random.normal(k_emb, (N, 1, node_dim), dtype=jnp.float32)
    params = init_params(k_par, node_dim, hidden_dim, attn_dim)

    schedule = build_schedule(child_lists, is_root_py)
    out = up_rvnn_forward(embeddings, schedule, params)
    out = jax.block_until_ready(out)

    ref = reference(embeddings, child_lists, is_root_py, params)
    assert out.shape == (hidden_dim,)
    assert jnp.allclose(out, ref, atol=1e-3, rtol=1e-3), (
        f"max abs err {jnp.max(jnp.abs(out - ref))}")

    print("KERNEL_OK")
</pallas_src>

<mosaic_0001>
module attributes {stable_mosaic.version = 11 : i64} {
  func.func @_up_rvnn_kernel(%arg0: i32, %arg1: memref<1x8x384xf32, #tpu.memory_space<vmem>>, %arg2: memref<1x8x128xf32, #tpu.memory_space<vmem>>, %arg3: memref<1x16x1xi32, #tpu.memory_space<vmem>>, %arg4: memref<128x384xf32, #tpu.memory_space<vmem>>, %arg5: memref<1x384xf32, #tpu.memory_space<vmem>>, %arg6: memref<128x128xf32, #tpu.memory_space<vmem>>) attributes {dimension_semantics = [#tpu.dimension_semantics<arbitrary>], iteration_bounds = array<i64: 4>, scalar_prefetch = 0 : i64, scratch_operands = 0 : i64, tpu.core_type = #tpu.core_type<tc>, window_params = [{transform_indices = @transform_0, window_bounds = array<i64: 1, 8, 384>}, {transform_indices = @transform_1, window_bounds = array<i64: 1, 8, 128>}, {transform_indices = @transform_2, window_bounds = array<i64: 1, 16, 1>}, {pipeline_mode = #tpu.pipeline_mode<synchronous>, transform_indices = @transform_3, window_bounds = array<i64: 128, 384>}, {pipeline_mode = #tpu.pipeline_mode<synchronous>, transform_indices = @transform_4, window_bounds = array<i64: 1, 384>}, {pipeline_mode = #tpu.pipeline_mode<synchronous>, transform_indices = @transform_5, window_bounds = array<i64: 128, 128>}]} {
    %c0_i32 = arith.constant 0 : i32
    %0 = arith.cmpi eq, %arg0, %c0_i32 : i32
    %1 = arith.extui %0 : i1 to i32
    %c0_i32_0 = arith.constant 0 : i32
    %2 = arith.cmpi ne, %1, %c0_i32_0 : i32
    scf.if %2 {
      %cst_25 = arith.constant 0.000000e+00 : f32
      %76 = vector.broadcast %cst_25 : f32 to vector<128x128xf32>
      %c0_26 = arith.constant 0 : index
      %c0_27 = arith.constant 0 : index
      %77 = vector.load %arg6[%c0_26, %c0_27] : memref<128x128xf32, #tpu.memory_space<vmem>>, vector<128x128xf32>
      tpu.vector_store %arg6[%c0_26, %c0_27], %76 {strides = array<i32>} : memref<128x128xf32, #tpu.memory_space<vmem>>, vector<128x128xf32>,
    } else {
    }
    %c0 = arith.constant 0 : index
    %c0_1 = arith.constant 0 : index
    %c0_2 = arith.constant 0 : index
    %3 = vector.load %arg3[%c0, %c0_1, %c0_2] : memref<1x16x1xi32, #tpu.memory_space<vmem>>, vector<1x16x1xi32>
    %4 = vector.shape_cast %3 : vector<1x16x1xi32> to vector<16x1xi32>
    %5 = tpu.iota {dimensions = array<i32: 1>} : vector<16x128xi32>
    %6 = vector.broadcast %4 : vector<16x1xi32> to vector<16x128xi32>
    %7 = arith.cmpi eq, %5, %6 : vector<16x128xi32>
    %8 = arith.extui %7 : vector<16x128xi1> to vector<16x128xi32>
    %9 = arith.sitofp %8 : vector<16x128xi32> to vector<16x128xf32>
    %c0_3 = arith.constant 0 : index
    %c0_4 = arith.constant 0 : index
    %10 = vector.load %arg6[%c0_3, %c0_4] : memref<128x128xf32, #tpu.memory_space<vmem>>, vector<128x128xf32>
    %cst = arith.constant dense<0.000000e+00> : vector<16x128xf32>
    %11 = tpu.matmul %9, %10, %cst {dimension_numbers = #tpu.dot_dimension_numbers<[1], [0], [0], [1], [0, 0, 1, 1], [], []>} : vector<16x128xf32>, vector<128x128xf32>, vector<16x128xf32> -> vector<16x128xf32>
    %c0_5 = arith.constant 0 : index
    %c0_6 = arith.constant 0 : index
    %c0_7 = arith.constant 0 : index
    %12 = vector.load %arg2[%c0_5, %c0_6, %c0_7] : memref<1x8x128xf32, #tpu.memory_space<vmem>>, vector<1x8x128xf32>
    %13 = vector.shape_cast %12 : vector<1x8x128xf32> to vector<8x128xf32>
    %cst_8 = arith.constant 0.000000e+00 : f32
    %14 = vector.broadcast %cst_8 : f32 to vector<8x128xf32>
    %15 = vector.extract_strided_slice %11 {offsets = [0, 0], sizes = [8, 128], strides = [1, 1]} : vector<16x128xf32> to vector<8x128xf32>
    %16 = arith.mulf %15, %13 : vector<8x128xf32>
    %cst_9 = arith.constant dense<0.000000e+00> : vector<8xf32>
    %17 = vector.multi_reduction <add>, %16, %cst_9 [1] : vector<8x128xf32> to vector<8xf32>
    %18 = vector.shape_cast %17 : vector<8xf32> to vector<8x1xf32>
    %19 = arith.negf %18 : vector<8x1xf32>
    %20 = math.exp %19 : vector<8x1xf32>
    %cst_10 = arith.constant 1.000000e+00 : f32
    %21 = vector.broadcast %cst_10 : f32 to vector<8x1xf32>
    %22 = arith.addf %21, %20 : vector<8x1xf32>
    %23 = arith.divf %21, %22 : vector<8x1xf32>
    %24 = vector.broadcast %23 : vector<8x1xf32> to vector<8x128xf32>
    %25 = arith.mulf %24, %15 : vector<8x128xf32>
    %26 = arith.addf %14, %25 : vector<8x128xf32>
    %27 = vector.extract_strided_slice %11 {offsets = [8, 0], sizes = [8, 128], strides = [1, 1]} : vector<16x128xf32> to vector<8x128xf32>
    %28 = arith.mulf %27, %13 : vector<8x128xf32>
    %cst_11 = arith.constant dense<0.000000e+00> : vector<8xf32>
    %29 = vector.multi_reduction <add>, %28, %cst_11 [1] : vector<8x128xf32> to vector<8xf32>
    %30 = vector.shape_cast %29 : vector<8xf32> to vector<8x1xf32>
    %31 = arith.negf %30 : vector<8x1xf32>
    %32 = math.exp %31 : vector<8x1xf32>
    %cst_12 = arith.constant 1.000000e+00 : f32
    %33 = vector.broadcast %cst_12 : f32 to vector<8x1xf32>
    %34 = arith.addf %33, %32 : vector<8x1xf32>
    %35 = arith.divf %33, %34 : vector<8x1xf32>
    %36 = vector.broadcast %35 : vector<8x1xf32> to vector<8x128xf32>
    %37 = arith.mulf %36, %27 : vector<8x128xf32>
    %38 = arith.addf %26, %37 : vector<8x128xf32>
    %c0_13 = arith.constant 0 : index
    %c0_14 = arith.constant 0 : index
    %c0_15 = arith.constant 0 : index
    %39 = vector.load %arg1[%c0_13, %c0_14, %c0_15] : memref<1x8x384xf32, #tpu.memory_space<vmem>>, vector<1x8x384xf32>
    %40 = vector.shape_cast %39 : vector<1x8x384xf32> to vector<8x384xf32>
    %c0_16 = arith.constant 0 : index
    %c0_17 = arith.constant 0 : index
    %41 = vector.load %arg4[%c0_16, %c0_17] : memref<128x384xf32, #tpu.memory_space<vmem>>, vector<128x384xf32>
    %cst_18 = arith.constant dense<0.000000e+00> : vector<8x384xf32>
    %42 = tpu.matmul %38, %41, %cst_18 {dimension_numbers = #tpu.dot_dimension_numbers<[1], [0], [0], [1], [0, 0, 1, 1], [], []>} : vector<8x128xf32>, vector<128x384xf32>, vector<8x384xf32> -> vector<8x384xf32>
    %c0_19 = arith.constant 0 : index
    %c0_20 = arith.constant 0 : index
    %43 = vector.load %arg5[%c0_19, %c0_20] : memref<1x384xf32, #tpu.memory_space<vmem>>, vector<1x384xf32>
    %44 = vector.broadcast %43 : vector<1x384xf32> to vector<8x384xf32>
    %45 = arith.addf %42, %44 : vector<8x384xf32>
    %46 = vector.extract_strided_slice %40 {offsets = [0, 0], sizes = [8, 128], strides = [1, 1]} : vector<8x384xf32> to vector<8x128xf32>
    %47 = vector.extract_strided_slice %45 {offsets = [0, 0], sizes = [8, 128], strides = [1, 1]} : vector<8x384xf32> to vector<8x128xf32>
    %48 = arith.addf %46, %47 : vector<8x128xf32>
    %49 = arith.negf %48 : vector<8x128xf32>
    %50 = math.exp %49 : vector<8x128xf32>
    %cst_21 = arith.constant 1.000000e+00 : f32
    %51 = vector.broadcast %cst_21 : f32 to vector<8x128xf32>
    %52 = arith.addf %51, %50 : vector<8x128xf32>
    %53 = arith.divf %51, %52 : vector<8x128xf32>
    %54 = vector.extract_strided_slice %40 {offsets = [0, 128], sizes = [8, 128], strides = [1, 1]} : vector<8x384xf32> to vector<8x128xf32>
    %55 = vector.extract_strided_slice %45 {offsets = [0, 128], sizes = [8, 128], strides = [1, 1]} : vector<8x384xf32> to vector<8x128xf32>
    %56 = arith.addf %54, %55 : vector<8x128xf32>
    %57 = arith.negf %56 : vector<8x128xf32>
    %58 = math.exp %57 : vector<8x128xf32>
    %cst_22 = arith.constant 1.000000e+00 : f32
    %59 = vector.broadcast %cst_22 : f32 to vector<8x128xf32>
    %60 = arith.addf %59, %58 : vector<8x128xf32>
    %61 = arith.divf %59, %60 : vector<8x128xf32>
    %62 = vector.extract_strided_slice %40 {offsets = [0, 256], sizes = [8, 128], strides = [1, 1]} : vector<8x384xf32> to vector<8x128xf32>
    %63 = vector.extract_strided_slice %45 {offsets = [0, 256], sizes = [8, 128], strides = [1, 1]} : vector<8x384xf32> to vector<8x128xf32>
    %64 = arith.mulf %53, %63 : vector<8x128xf32>
    %65 = arith.addf %62, %64 : vector<8x128xf32>
    %66 = math.tanh %65 : vector<8x128xf32>
    %cst_23 = arith.constant 1.000000e+00 : f32
    %67 = vector.broadcast %cst_23 : f32 to vector<8x128xf32>
    %68 = arith.subf %67, %61 : vector<8x128xf32>
    %69 = arith.mulf %68, %66 : vector<8x128xf32>
    %70 = arith.mulf %61, %38 : vector<8x128xf32>
    %71 = arith.addf %69, %70 : vector<8x128xf32>
    %c8_i32 = arith.constant 8 : i32
    %72 = arith.muli %arg0, %c8_i32 : i32
    %73 = tpu.assume_multiple %72, 8 : i32
    %74 = arith.index_cast %73 : i32 to index
    %c0_24 = arith.constant 0 : index
    %75 = vector.load %arg6[%74, %c0_24] : memref<128x128xf32, #tpu.memory_space<vmem>>, vector<8x128xf32>
    tpu.vector_store %arg6[%74, %c0_24], %71 {strides = array<i32>} : memref<128x128xf32, #tpu.memory_space<vmem>>, vector<8x128xf32>,
    return
  }
  func.func @transform_0(%arg0: i32) -> (i32, i32, i32) {
    %c0_i32 = arith.constant 0 : i32
    %c0_i32_0 = arith.constant 0 : i32
    %c0_i32_1 = arith.constant 0 : i32
    return %arg0, %c0_i32, %c0_i32_0 : i32, i32, i32
  }
  func.func @transform_1(%arg0: i32) -> (i32, i32, i32) {
    %c0_i32 = arith.constant 0 : i32
    %c0_i32_0 = arith.constant 0 : i32
    %c0_i32_1 = arith.constant 0 : i32
    return %arg0, %c0_i32, %c0_i32_0 : i32, i32, i32
  }
  func.func @transform_2(%arg0: i32) -> (i32, i32, i32) {
    %c0_i32 = arith.constant 0 : i32
    %c0_i32_0 = arith.constant 0 : i32
    %c0_i32_1 = arith.constant 0 : i32
    return %arg0, %c0_i32, %c0_i32_0 : i32, i32, i32
  }
  func.func @transform_3(%arg0: i32) -> (i32, i32) {
    %c0_i32 = arith.constant 0 : i32
    %c0_i32_0 = arith.constant 0 : i32
    %c0_i32_1 = arith.constant 0 : i32
    return %c0_i32, %c0_i32_0 : i32, i32
  }
  func.func @transform_4(%arg0: i32) -> (i32, i32) {
    %c0_i32 = arith.constant 0 : i32
    %c0_i32_0 = arith.constant 0 : i32
    %c0_i32_1 = arith.constant 0 : i32
    return %c0_i32, %c0_i32_0 : i32, i32
  }
  func.func @transform_5(%arg0: i32) -> (i32, i32) {
    %c0_i32 = arith.constant 0 : i32
    %c0_i32_0 = arith.constant 0 : i32
    %c0_i32_1 = arith.constant 0 : i32
    return %c0_i32, %c0_i32_0 : i32, i32
  }
}

</mosaic_0001>

<llo_original>
// kernel: tpu_custom_call.1
$region0: #{tpu_custom_call.1}
  #allocation0 [shape = 'u32[]', space=smem, size = 0x4, offset = 0x4, fixed_abs, tag = 'smem constant byte address 0x4 - core index']
  #allocation1 [shape = 'u32[144,128]{1,0:T(1,128)}', space=vmem, size = 0x12000, scoped, tag = 'internal scratch']
  %s0 = inlined_call_operand.hbm [shape: f32[4,8,384], index: 0, kind: input, shape index: {}]
  %s1 = inlined_call_operand.vmem [shape: f32[4,8,128], index: 1, kind: input, shape index: {}]
  %s2 = inlined_call_operand.vmem [shape: s32[4,16,1], index: 2, kind: input, shape index: {}]
  %s3 = inlined_call_operand.hbm [shape: f32[128,384], index: 3, kind: input, shape index: {}]
  %s4 = inlined_call_operand.vmem [shape: f32[1,384], index: 4, kind: input, shape index: {}]
  %s5 = inlined_call_operand.hbm [shape: f32[128,128], index: 5, kind: output, shape index: {}]
  %s6 = sld [smem:[#allocation0]]
  $region65: #{tpu_custom_call.1} parent=0
    _
  %s8 = ssub.s32 1, %s6
  %s9 = scalar_select 0, %s8, %s6
  $region1: #{tpu_custom_call.1} parent=0
    #allocation2 [shape = 'u8[24576]{0}', space=vmem, size = 0x6000, scoped, tag = 'input window, operand 0']
    #allocation3 [shape = 's32[2]{0}', space=sflag, size = 0x8, scoped, tag = 'scoped memory for tpu_custom_call.1']
    #allocation4 [shape = 's32[2]{0}', space=sflag, size = 0x8, scoped, tag = 'scoped memory for tpu_custom_call.1']
    #allocation5 [shape = 'u8[196608]{0}', space=vmem, size = 0x30000, scoped, tag = 'input window, operand 3, single buffered']
    #allocation6 [shape = 's32[1]{0}', space=sflag, size = 0x4, scoped, tag = 'scoped memory for tpu_custom_call.1']
    #allocation7 [shape = 'u8[65536]{0}', space=vmem, size = 0x10000, scoped, tag = 'output window, operand 0, single buffered']
    %10 = vsyncpa [#allocation3], 0
    %s11 = scalar_lea.sflag [#allocation3], 1
    %12 = vsyncpa %s11, 0
    %13 = vsyncpa [#allocation6], 0
    %14 = vsyncpa [#allocation4], 0
    loop: start=0, step=1, limit=6
    $region2: #{tpu_custom_call.1} parent=1 // loop_pre_header
      _
    $region3: #{tpu_custom_call.1} parent=1 // loop_header
      %s16 = sphi 0, %s20
      %p17 = scmp.ge.s32.totalorder %s16, 6
      %s26 = sphi 0, %s28
      %s29 = sphi 0, %s26
      %s30 = sphi 0, %s29
      %s46 = sphi 0, %s30
      %s52 = sphi 0, %s54
      %s55 = sphi 0, %s52
      %s56 = sphi 0, %s55
      %s72 = sphi 0, %s56
      %s78 = sphi 0, %s80
      %s81 = sphi 0, %s78
      %s82 = sphi 0, %s81
      %s98 = sphi 0, %s82
      %s102 = sphi 0, %s102
      %s104 = sphi 0, %s102
      %s105 = sphi 0, %s104
      %s119 = sphi 0, %s105
      %s123 = sphi 0, %s123
      %s125 = sphi 0, %s123
      %s126 = sphi 0, %s125
      %s140 = sphi 0, %s126
      %s144 = sphi 0, %s144
      %s146 = sphi 0, %s144
      %s147 = sphi 0, %s146
      %s161 = sphi 0, %s147
    $region4: #{tpu_custom_call.1} parent=1 // loop_header_branch
      %19 = sbr.rel (%p17) target = $region8
    $region5: #{tpu_custom_call.1} parent=1 // loop_body
      %s21 = ssub.s32 %s16, 1
      %s22 = ssub.s32 %s16, 2
      %s23 = sadd.s32 %s16, 1
      %s24 = ssub.s32 %s16, %s23
      %p25 = scmp.eq.s32.totalorder %s24, 0
      %s27 = sadd.s32 %s26, 1
      %s28 = scalar_select %p25, %s26, %s27
      %p31 = pneg %p25
      %p32 = scmp.eq.s32.totalorder %s16, 3
      %p33 = por %p31, %p32
      %p34 = scmp.ne.s32.totalorder %s26, %s29
      %p35 = scmp.eq.s32.totalorder %s16, 0
      %p36 = por %p34, %p35
      %p37 = scmp.ne.s32.totalorder %s26, %s29
      %p38 = scmp.eq.s32.totalorder %s21, 3
      %p39 = por %p37, %p38
      %p40 = scmp.ne.s32.totalorder %s29, %s30
      %p41 = scmp.eq.s32.totalorder %s21, 0
      %p42 = por %p40, %p41
      %p43 = scmp.ne.s32.totalorder %s29, %s30
      %p44 = scmp.eq.s32.totalorder %s22, 3
      %p45 = por %p43, %p44
      %p47 = scmp.ne.s32.totalorder %s30, %s46
      %p48 = scmp.eq.s32.totalorder %s22, 0
      %p49 = por %p47, %p48
      %s50 = ssub.s32 %s16, %s23
      %p51 = scmp.eq.s32.totalorder %s50, 0
      %s53 = sadd.s32 %s52, 1
      %s54 = scalar_select %p51, %s52, %s53
      %p57 = pneg %p51
      %p58 = scmp.eq.s32.totalorder %s16, 3
      %p59 = por %p57, %p58
      %p60 = scmp.ne.s32.totalorder %s52, %s55
      %p61 = scmp.eq.s32.totalorder %s16, 0
      %p62 = por %p60, %p61
      %p63 = scmp.ne.s32.totalorder %s52, %s55
      %p64 = scmp.eq.s32.totalorder %s21, 3
      %p65 = por %p63, %p64
      %p66 = scmp.ne.s32.totalorder %s55, %s56
      %p67 = scmp.eq.s32.totalorder %s21, 0
      %p68 = por %p66, %p67
      %p69 = scmp.ne.s32.totalorder %s55, %s56
      %p70 = scmp.eq.s32.totalorder %s22, 3
      %p71 = por %p69, %p70
      %p73 = scmp.ne.s32.totalorder %s56, %s72
      %p74 = scmp.eq.s32.totalorder %s22, 0
      %p75 = por %p73, %p74
      %s76 = ssub.s32 %s16, %s23
      %p77 = scmp.eq.s32.totalorder %s76, 0
      %s79 = sadd.s32 %s78, 1
      %s80 = scalar_select %p77, %s78, %s79
      %p83 = pneg %p77
      %p84 = scmp.eq.s32.totalorder %s16, 3
      %p85 = por %p83, %p84
      %p86 = scmp.ne.s32.totalorder %s78, %s81
      %p87 = scmp.eq.s32.totalorder %s16, 0
      %p88 = por %p86, %p87
      %p89 = scmp.ne.s32.totalorder %s78, %s81
      %p90 = scmp.eq.s32.totalorder %s21, 3
      %p91 = por %p89, %p90
      %p92 = scmp.ne.s32.totalorder %s81, %s82
      %p93 = scmp.eq.s32.totalorder %s21, 0
      %p94 = por %p92, %p93
      %p95 = scmp.ne.s32.totalorder %s81, %s82
      %p96 = scmp.eq.s32.totalorder %s22, 3
      %p97 = por %p95, %p96
      %p99 = scmp.ne.s32.totalorder %s82, %s98
      %p100 = scmp.eq.s32.totalorder %s22, 0
      %p101 = por %p99, %p100
      %s103 = sadd.s32 %s102, 1
      %p106 = scmp.eq.s32.totalorder %s16, 3
      %p107 = scmp.ne.s32.totalorder %s102, %s104
      %p108 = scmp.eq.s32.totalorder %s16, 0
      %p109 = por %p107, %p108
      %p110 = scmp.ne.s32.totalorder %s102, %s104
      %p111 = scmp.eq.s32.totalorder %s21, 3
      %p112 = por %p110, %p111
      %p113 = scmp.ne.s32.totalorder %s104, %s105
      %p114 = scmp.eq.s32.totalorder %s21, 0
      %p115 = por %p113, %p114
      %p116 = scmp.ne.s32.totalorder %s104, %s105
      %p117 = scmp.eq.s32.totalorder %s22, 3
      %p118 = por %p116, %p117
      %p120 = scmp.ne.s32.totalorder %s105, %s119
      %p121 = scmp.eq.s32.totalorder %s22, 0
      %p122 = por %p120, %p121
      %s124 = sadd.s32 %s123, 1
      %p127 = scmp.eq.s32.totalorder %s16, 3
      %p128 = scmp.ne.s32.totalorder %s123, %s125
      %p129 = scmp.eq.s32.totalorder %s16, 0
      %p130 = por %p128, %p129
      %p131 = scmp.ne.s32.totalorder %s123, %s125
      %p132 = scmp.eq.s32.totalorder %s21, 3
      %p133 = por %p131, %p132
      %p134 = scmp.ne.s32.totalorder %s125, %s126
      %p135 = scmp.eq.s32.totalorder %s21, 0
      %p136 = por %p134, %p135
      %p137 = scmp.ne.s32.totalorder %s125, %s126
      %p138 = scmp.eq.s32.totalorder %s22, 3
      %p139 = por %p137, %p138
      %p141 = scmp.ne.s32.totalorder %s126, %s140
      %p142 = scmp.eq.s32.totalorder %s22, 0
      %p143 = por %p141, %p142
      %s145 = sadd.s32 %s144, 1
      %p148 = scmp.eq.s32.totalorder %s16, 3
      %p149 = scmp.ne.s32.totalorder %s144, %s146
      %p150 = scmp.eq.s32.totalorder %s16, 0
      %p151 = por %p149, %p150
      %p152 = scmp.ne.s32.totalorder %s144, %s146
      %p153 = scmp.eq.s32.totalorder %s21, 3
      %p154 = por %p152, %p153
      %p155 = scmp.ne.s32.totalorder %s146, %s147
      %p156 = scmp.eq.s32.totalorder %s21, 0
      %p157 = por %p155, %p156
      %p158 = scmp.ne.s32.totalorder %s146, %s147
      %p159 = scmp.eq.s32.totalorder %s22, 3
      %p160 = por %p158, %p159
      %p162 = scmp.ne.s32.totalorder %s147, %s161
      %p163 = scmp.eq.s32.totalorder %s22, 0
      %p164 = por %p162, %p163
      %p165 = scmp.le.s32.totalorder 1, %s16
      %p166 = scmp.lt.s32.totalorder %s16, 5
      %p167 = pnand %p165, %p166
      %p168 = pneg %p167
      // Predicated region
      $region9: #{tpu_custom_call.1} parent=5 // pred_check
        _
      $region10: #{tpu_custom_call.1} parent=5 // pred_check_branch
        %170 = sbr.rel (%p167) target = $region12
      $region11: #{tpu_custom_call.1} parent=5 // pred_region
        %s171 = ssub.s32 %s16, 1
        // Predicated region
        $region13: #{tpu_custom_call.1} parent=11 // pred_check
          %p172 = pneg %p115
        $region14: #{tpu_custom_call.1} parent=11 // pred_check_branch
          %174 = sbr.rel (%p172) target = $region16
        $region15: #{tpu_custom_call.1} parent=11 // pred_region
          %s176 = ssub.s32 6144, 6144
          %177 = vsyncadd [#allocation6], %s176
          %s178 = sshll.u32 [#allocation5], 4
          %s179 = int_to_ptr.vmem [resolvable:$true] %s178
          %184 = dma.hbm_to_vmem [thread:$0]  %s3, 6144, %s179, [#allocation6], 384, 384, 24
        $region16: #{tpu_custom_call.1} parent=11 // pred_fallthru
          _
        // Predicated region
        $region17: #{tpu_custom_call.1} parent=11 // pred_check
          %p185 = pneg %p136
        $region18: #{tpu_custom_call.1} parent=11 // pred_check_branch
          %187 = sbr.rel (%p185) target = $region20
        $region19: #{tpu_custom_call.1} parent=11 // pred_region
          _
        $region20: #{tpu_custom_call.1} parent=11 // pred_fallthru
          _
      $region12: #{tpu_custom_call.1} parent=5 // pred_fallthru
        _
      %p188 = scmp.lt.s32.totalorder %s16, 4
      // Predicated region
      $region21: #{tpu_custom_call.1} parent=5 // pred_check
        %p189 = pneg %p188
      $region22: #{tpu_custom_call.1} parent=5 // pred_check_branch
        %191 = sbr.rel (%p189) target = $region24
      $region23: #{tpu_custom_call.1} parent=5 // pred_region
        // Predicated region
        $region25: #{tpu_custom_call.1} parent=23 // pred_check
          %p192 = pneg %p36
        $region26: #{tpu_custom_call.1} parent=23 // pred_check_branch
          %194 = sbr.rel (%p192) target = $region28
        $region27: #{tpu_custom_call.1} parent=23 // pred_region
          %s195 = sand.u32 %s26, 1
          %s196 = scalar_lea.sflag [#allocation3], %s195
          %s197 = sand.u32 %s26, 1
          %s198 = smul.addr %s197, 24
          %s199 = scalar_lea.vmem [#allocation2], %s198
          %s201 = ssub.s32 384, 384
          %202 = vsyncadd %s196, %s201
          %s203 = smul.addr %s16, 3
          %s204 = smul.addr %s203, 128
          %s205 = scalar_lea.hbm %s0, %s204
          %s207 = sshll.u32 %s199, 4
          %s208 = int_to_ptr.vmem [resolvable:$true] %s207
          %210 = dma.hbm_to_vmem [thread:$0]  %s205, 384, %s208, %s196
        $region28: #{tpu_custom_call.1} parent=23 // pred_fallthru
          _
        // Predicated region
        $region29: #{tpu_custom_call.1} parent=23 // pred_check
          %p211 = pneg %p62
        $region30: #{tpu_custom_call.1} parent=23 // pred_check_branch
          %213 = sbr.rel (%p211) target = $region32
        $region31: #{tpu_custom_call.1} parent=23 // pred_region
          %p214 = scmp.lt.s32.totalorder %s16, 3
          %s215 = scalar_select %p214, %s16, 3
          %s216 = smul.addr %s215, 8
          %s217 = scalar_lea.vmem %s1, %s216
        $region32: #{tpu_custom_call.1} parent=23 // pred_fallthru
          _
        // Predicated region
        $region33: #{tpu_custom_call.1} parent=23 // pred_check
          %p218 = pneg %p88
        $region34: #{tpu_custom_call.1} parent=23 // pred_check_branch
          %220 = sbr.rel (%p218) target = $region36
        $region35: #{tpu_custom_call.1} parent=23 // pred_region
          %p221 = scmp.lt.s32.totalorder %s16, 3
          %s222 = scalar_select %p221, %s16, 3
          %s223 = smul.addr %s222, 2
          %s224 = smul.addr %s223, 8
          %s225 = scalar_lea.vmem %s2, %s224
        $region36: #{tpu_custom_call.1} parent=23 // pred_fallthru
          _
      $region24: #{tpu_custom_call.1} parent=5 // pred_fallthru
        _
      %p226 = scmp.le.s32.totalorder 1, %s16
      %p227 = scmp.lt.s32.totalorder %s16, 5
      %p228 = pnand %p226, %p227
      %p229 = pneg %p228
      // Predicated region
      $region37: #{tpu_custom_call.1} parent=5 // pred_check
        _
      $region38: #{tpu_custom_call.1} parent=5 // pred_check_branch
        %231 = sbr.rel (%p228) target = $region40
      $region39: #{tpu_custom_call.1} parent=5 // pred_region
        %s232 = ssub.s32 %s16, 1
        %s233 = sand.u32 %s29, 1
        %s234 = scalar_lea.sflag [#allocation3], %s233
        %s235 = sand.u32 %s29, 1
        %s236 = smul.addr %s235, 24
        %s237 = scalar_lea.vmem [#allocation2], %s236
        // Predicated region
        $region41: #{tpu_custom_call.1} parent=39 // pred_check
          %p238 = pneg %p42
        $region42: #{tpu_custom_call.1} parent=39 // pred_check_branch
          %240 = sbr.rel (%p238) target = $region44
        $region43: #{tpu_custom_call.1} parent=39 // pred_region
          %241 = dma.done %s234, 384
        $region44: #{tpu_custom_call.1} parent=39 // pred_fallthru
          _
        // Predicated region
        $region45: #{tpu_custom_call.1} parent=39 // pred_check
          %p242 = pneg %p115
        $region46: #{tpu_custom_call.1} parent=39 // pred_check_branch
          %244 = sbr.rel (%p242) target = $region48
        $region47: #{tpu_custom_call.1} parent=39 // pred_region
          %245 = dma.done [#allocation6], 6144
        $region48: #{tpu_custom_call.1} parent=39 // pred_fallthru
          _
        %s246 = sand.u32 %s29, 1
        %s247 = scalar_lea.sflag [#allocation3], %s246
        %s248 = sand.u32 %s29, 1
        %s249 = smul.addr %s248, 24
        %s250 = scalar_lea.vmem [#allocation2], %s249
        %p251 = pneg %p42
        %p252 = pneg %p39
        %p253 = scmp.lt.s32.totalorder %s21, 3
        %s254 = scalar_select %p253, %s21, 3
        %s255 = smul.addr %s254, 8
        %s256 = scalar_lea.vmem %s1, %s255
        %p257 = pneg %p68
        %p258 = pneg %p65
        %p259 = scmp.lt.s32.totalorder %s21, 3
        %s260 = scalar_select %p259, %s21, 3
        %s261 = smul.addr %s260, 2
        %s262 = smul.addr %s261, 8
        %s263 = scalar_lea.vmem %s2, %s262
        %p264 = pneg %p94
        %p265 = pneg %p91
        %p266 = pneg %p115
        %p267 = pneg %p112
        %p268 = pneg %p136
        %p269 = pneg %p133
        %p270 = pneg %p157
        %p271 = pneg %p154
        %p272 = scmp.lt.s32.totalorder %s21, 3
        %s273 = scalar_select %p272, %s21, 3
        %s274 = smul.addr %s273, 8
        %s275 = scalar_lea.vmem %s1, %s274
        %p276 = scmp.lt.s32.totalorder %s21, 3
        %s277 = scalar_select %p276, %s21, 3
        %s278 = smul.addr %s277, 2
        %s279 = smul.addr %s278, 8
        %s280 = scalar_lea.vmem %s2, %s279
        %p281 = scmp.eq.s32.totalorder %s21, 0
        // Predicated region
        $region49: #{tpu_custom_call.1} parent=39 // pred_check
          %p282 = pneg %p281
        $region50: #{tpu_custom_call.1} parent=39 // pred_check_branch
          %284 = sbr.rel (%p282) target = $region52
        $region51: #{tpu_custom_call.1} parent=39 // pred_region
          %285 = vst [vmem:[#allocation7] sm:$0xff] 0.0
          %286 = vst [vmem:[#allocation7 + $0x8] sm:$0xff] 0.0
          %287 = vst [vmem:[#allocation7 + $0x10] sm:$0xff] 0.0
          %288 = vst [vmem:[#allocation7 + $0x18] sm:$0xff] 0.0
          %289 = vst [vmem:[#allocation7 + $0x20] sm:$0xff] 0.0
          %290 = vst [vmem:[#allocation7 + $0x28] sm:$0xff] 0.0
          %291 = vst [vmem:[#allocation7 + $0x30] sm:$0xff] 0.0
          %292 = vst [vmem:[#allocation7 + $0x38] sm:$0xff] 0.0
          %293 = vst [vmem:[#allocation7 + $0x40] sm:$0xff] 0.0
          %294 = vst [vmem:[#allocation7 + $0x48] sm:$0xff] 0.0
          %295 = vst [vmem:[#allocation7 + $0x50] sm:$0xff] 0.0
          %296 = vst [vmem:[#allocation7 + $0x58] sm:$0xff] 0.0
          %297 = vst [vmem:[#allocation7 + $0x60] sm:$0xff] 0.0
          %298 = vst [vmem:[#allocation7 + $0x68] sm:$0xff] 0.0
          %299 = vst [vmem:[#allocation7 + $0x70] sm:$0xff] 0.0
          %300 = vst [vmem:[#allocation7 + $0x78] sm:$0xff] 0.0
        $region52: #{tpu_custom_call.1} parent=39 // pred_fallthru
          _
        %v301 = vld [vmem:[%s280] sm:$0xff]
        %v302 = vld [vmem:[%s280 + $0x8] sm:$0xff]
        %v303 = vlaneseq
        %v304 = vand.u32 %v303, 127
        %305 = vset.pattern.permute.xlu0 0
        %306 = vperm.xlu0 %305, %v301
        %v307 = vpop.permute.xlu0 %306
        %308 = vset.pattern.permute.xlu0 0
        %309 = vperm.xlu0 %308, %v302
        %v310 = vpop.permute.xlu0 %309
        %vm311 = vcmp.eq.s32.totalorder %v304, %v307
        %vm312 = vcmp.eq.s32.totalorder %v304, %v310
        %v313 = vsel %vm311, 1, 0
        %v314 = vsel %vm312, 1, 0
        %v315 = vcvt.s32.f32 %v313
        %v316 = vcvt.s32.f32 %v314
        %v317 = vld [vmem:[#allocation7] sm:$0xff]
        %v318 = vld [vmem:[#allocation7 + $0x8] sm:$0xff]
        %v319 = vld [vmem:[#allocation7 + $0x10] sm:$0xff]
        %v320 = vld [vmem:[#allocation7 + $0x18] sm:$0xff]
        %v321 = vld [vmem:[#allocation7 + $0x20] sm:$0xff]
        %v322 = vld [vmem:[#allocation7 + $0x28] sm:$0xff]
        %v323 = vld [vmem:[#allocation7 + $0x30] sm:$0xff]
        %v324 = vld [vmem:[#allocation7 + $0x38] sm:$0xff]
        %v325 = vld [vmem:[#allocation7 + $0x40] sm:$0xff]
        %v326 = vld [vmem:[#allocation7 + $0x48] sm:$0xff]
        %v327 = vld [vmem:[#allocation7 + $0x50] sm:$0xff]
        %v328 = vld [vmem:[#allocation7 + $0x58] sm:$0xff]
        %v329 = vld [vmem:[#allocation7 + $0x60] sm:$0xff]
        %v330 = vld [vmem:[#allocation7 + $0x68] sm:$0xff]
        %v331 = vld [vmem:[#allocation7 + $0x70] sm:$0xff]
        %v332 = vld [vmem:[#allocation7 + $0x78] sm:$0xff]
        %333 = vmatprep.subr.mxu0 0.0
        %334 = vmatpush1.msra.mxu0 %v332
        %335 = vmatprep.subr.mxu0 0.0
        %336 = vmatpush1.msra.mxu0 %v331
        %337 = vmatprep.subr.mxu0 0.0
        %338 = vmatpush1.msra.mxu0 %v330
        %339 = vmatprep.subr.mxu0 0.0
        %340 = vmatpush1.msra.mxu0 %v329
        %341 = vmatprep.subr.mxu0 0.0
        %342 = vmatpush1.msra.mxu0 %v328
        %343 = vmatprep.subr.mxu0 0.0
        %344 = vmatpush1.msra.mxu0 %v327
        %345 = vmatprep.subr.mxu0 0.0
        %346 = vmatpush1.msra.mxu0 %v326
        %347 = vmatprep.subr.mxu0 0.0
        %348 = vmatpush1.msra.mxu0 %v325
        %349 = vmatprep.subr.mxu0 0.0
        %350 = vmatpush1.msra.mxu0 %v324
        %351 = vmatprep.subr.mxu0 0.0
        %352 = vmatpush1.msra.mxu0 %v323
        %353 = vmatprep.subr.mxu0 0.0
        %354 = vmatpush1.msra.mxu0 %v322
        %355 = vmatprep.subr.mxu0 0.0
        %356 = vmatpush1.msra.mxu0 %v321
        %357 = vmatprep.subr.mxu0 0.0
        %358 = vmatpush1.msra.mxu0 %v320
        %359 = vmatprep.subr.mxu0 0.0
        %360 = vmatpush1.msra.mxu0 %v319
        %361 = vmatprep.subr.mxu0 0.0
        %362 = vmatpush1.msra.mxu0 %v318
        %363 = vmatprep.subr.mxu0 0.0
        %364 = vmatpush1.msra.mxu0 %v317
        %365 = vmatprep.subr.mxu0 0.0
        %366 = vmatpush2.msra.mxu0 0.0
        %367 = vmatprep.subr.mxu0 0.0
        %368 = vmatpush2.msra.mxu0 0.0
        %369 = vmatprep.subr.mxu0 0.0
        %370 = vmatpush2.msra.mxu0 0.0
        %371 = vmatprep.subr.mxu0 0.0
        %372 = vmatpush2.msra.mxu0 0.0
        %373 = vmatprep.subr.mxu0 0.0
        %374 = vmatpush2.msra.mxu0 0.0
        %375 = vmatprep.subr.mxu0 0.0
        %376 = vmatpush2.msra.mxu0 0.0
        %377 = vmatprep.subr.mxu0 0.0
        %378 = vmatpush2.msra.mxu0 0.0
        %379 = vmatprep.subr.mxu0 0.0
        %380 = vmatpush2.msra.mxu0 0.0
        %381 = vmatprep.subr.mxu0 0.0
        %382 = vmatpush2.msra.mxu0 0.0
        %383 = vmatprep.subr.mxu0 0.0
        %384 = vmatpush2.msra.mxu0 0.0
        %385 = vmatprep.subr.mxu0 0.0
        %386 = vmatpush2.msra.mxu0 0.0
        %387 = vmatprep.subr.mxu0 0.0
        %388 = vmatpush2.msra.mxu0 0.0
        %389 = vmatprep.subr.mxu0 0.0
        %390 = vmatpush2.msra.mxu0 0.0
        %391 = vmatprep.subr.mxu0 0.0
        %392 = vmatpush2.msra.mxu0 0.0
        %393 = vmatprep.subr.mxu0 0.0
        %394 = vmatpush2.msra.mxu0 0.0
        %395 = vmatprep.subr.mxu0 0.0
        %396 = vmatpush2.msra.mxu0 0.0
        %397 = vmatprep.mubr.f32.mxu0 0.0
        %398 = vmatmul.mubr.f32.gmra.mxu0 %v315
        %v399 = vpop.f32.mrf.mxu0
        %v400 = vadd.f32 0.0, %v399
        %v401 = vpop.f32.mrf.mxu0
        %402 = vmatprep.mubr.f32.mxu0 0.0
        %403 = vmatmul.mubr.f32.gmra.mxu0 %v316
        %v404 = vpop.f32.mrf.mxu0
        %v405 = vadd.f32 0.0, %v404
        %v406 = vpop.f32.mrf.mxu0
        %407 = vdwg.mxu0
        %v408 = vld [vmem:[%s275] sm:$0xff]
        %v409 = vmul.f32 %v400, %v408
        %410 = vadd.xlane.f32.xlu0 %v409
        %v411 = vpop.xlane.xlu0 %410
        %v412 = vxor.u32 %v411, 2147483648
        %v413 = vmul.f32 %v412, 1.442695
        %v414 = vpow.pop %v413
        %v415 = vadd.f32 %v414, 1.0
        %v416 = vrcp.pop %v415
        %v417 = vmul.f32 1.0, %v416
        %v418 = vmul.f32 %v417, %v400
        %v419 = vadd.f32 %v418, 0.0
        %v420 = vmul.f32 %v405, %v408
        %421 = vadd.xlane.f32.xlu0 %v420
        %v422 = vpop.xlane.xlu0 %421
        %v423 = vxor.u32 %v422, 2147483648
        %v424 = vmul.f32 %v423, 1.442695
        %v425 = vpow.pop %v424
        %v426 = vadd.f32 %v425, 1.0
        %v427 = vrcp.pop %v426
        %v428 = vmul.f32 1.0, %v427
        %v429 = vmul.f32 %v428, %v405
        %v430 = vadd.f32 %v419, %v429
        %v431 = vld [vmem:[%s237] sm:$0xff]
        %v432 = vld [vmem:[%s237 + $0x8] sm:$0xff]
        %v433 = vld [vmem:[%s237 + $0x10] sm:$0xff]
        %v434 = vld [vmem:[#allocation5] sm:$0xff]
        %v435 = vld [vmem:[#allocation5 + $0x8] sm:$0xff]
        %v436 = vld [vmem:[#allocation5 + $0x10] sm:$0xff]
        %v437 = vld [vmem:[#allocation5 + $0x18] sm:$0xff]
        %v438 = vld [vmem:[#allocation5 + $0x20] sm:$0xff]
        %v439 = vld [vmem:[#allocation5 + $0x28] sm:$0xff]
        %v440 = vld [vmem:[#allocation5 + $0x30] sm:$0xff]
        %v441 = vld [vmem:[#allocation5 + $0x38] sm:$0xff]
        %v442 = vld [vmem:[#allocation5 + $0x40] sm:$0xff]
        %v443 = vld [vmem:[#allocation5 + $0x48] sm:$0xff]
        %v444 = vld [vmem:[#allocation5 + $0x50] sm:$0xff]
        %v445 = vld [vmem:[#allocation5 + $0x58] sm:$0xff]
        %v446 = vld [vmem:[#allocation5 + $0x60] sm:$0xff]
        %v447 = vld [vmem:[#allocation5 + $0x68] sm:$0xff]
        %v448 = vld [vmem:[#allocation5 + $0x70] sm:$0xff]
        %v449 = vld [vmem:[#allocation5 + $0x78] sm:$0xff]
        %v450 = vld [vmem:[#allocation5 + $0x80] sm:$0xff]
        %v451 = vld [vmem:[#allocation5 + $0x88] sm:$0xff]
        %v452 = vld [vmem:[#allocation5 + $0x90] sm:$0xff]
        %v453 = vld [vmem:[#allocation5 + $0x98] sm:$0xff]
        %v454 = vld [vmem:[#allocation5 + $0xa0] sm:$0xff]
        %v455 = vld [vmem:[#allocation5 + $0xa8] sm:$0xff]
        %v456 = vld [vmem:[#allocation5 + $0xb0] sm:$0xff]
        %v457 = vld [vmem:[#allocation5 + $0xb8] sm:$0xff]
        %v458 = vld [vmem:[#allocation5 + $0xc0] sm:$0xff]
        %v459 = vld [vmem:[#allocation5 + $0xc8] sm:$0xff]
        %v460 = vld [vmem:[#allocation5 + $0xd0] sm:$0xff]
        %v461 = vld [vmem:[#allocation5 + $0xd8] sm:$0xff]
        %v462 = vld [vmem:[#allocation5 + $0xe0] sm:$0xff]
        %v463 = vld [vmem:[#allocation5 + $0xe8] sm:$0xff]
        %v464 = vld [vmem:[#allocation5 + $0xf0] sm:$0xff]
        %v465 = vld [vmem:[#allocation5 + $0xf8] sm:$0xff]
        %v466 = vld [vmem:[#allocation5 + $0x100] sm:$0xff]
        %v467 = vld [vmem:[#allocation5 + $0x108] sm:$0xff]
        %v468 = vld [vmem:[#allocation5 + $0x110] sm:$0xff]
        %v469 = vld [vmem:[#allocation5 + $0x118] sm:$0xff]
        %v470 = vld [vmem:[#allocation5 + $0x120] sm:$0xff]
        %v471 = vld [vmem:[#allocation5 + $0x128] sm:$0xff]
        %v472 = vld [vmem:[#allocation5 + $0x130] sm:$0xff]
        %v473 = vld [vmem:[#allocation5 + $0x138] sm:$0xff]
        %v474 = vld [vmem:[#allocation5 + $0x140] sm:$0xff]
        %v475 = vld [vmem:[#allocation5 + $0x148] sm:$0xff]
        %v476 = vld [vmem:[#allocation5 + $0x150] sm:$0xff]
        %v477 = vld [vmem:[#allocation5 + $0x158] sm:$0xff]
        %v478 = vld [vmem:[#allocation5 + $0x160] sm:$0xff]
        %v479 = vld [vmem:[#allocation5 + $0x168] sm:$0xff]
        %v480 = vld [vmem:[#allocation5 + $0x170] sm:$0xff]
        %v481 = vld [vmem:[#allocation5 + $0x178] sm:$0xff]
        %v482 = vld [vmem:[%s4] sm:$0x7]
        %v484 = vlaneseq
        %v485 = vshrl.u32 %v484, 7
        %v486 = vsub.s32 0, %v485
        %v487 = vrot.slane %v482, %v486
        %v488 = vlaneseq
        %v489 = vshrl.u32 %v488, 7
        %v490 = vsub.s32 1, %v489
        %v491 = vrot.slane %v482, %v490
        %v492 = vlaneseq
        %v493 = vshrl.u32 %v492, 7
        %v494 = vsub.s32 2, %v493
        %v495 = vrot.slane %v482, %v494
        %499 = vmatprep.subr.mxu0 %v480
        %500 = vmatpush1.msra.mxu0 %v479
        %501 = vmatprep.subr.mxu0 %v477
        %502 = vmatpush1.msra.mxu0 %v476
        %503 = vmatprep.subr.mxu0 %v474
        %504 = vmatpush1.msra.mxu0 %v473
        %505 = vmatprep.subr.mxu0 %v471
        %506 = vmatpush1.msra.mxu0 %v470
        %507 = vmatprep.subr.mxu0 %v468
        %508 = vmatpush1.msra.mxu0 %v467
        %509 = vmatprep.subr.mxu0 %v465
        %510 = vmatpush1.msra.mxu0 %v464
        %511 = vmatprep.subr.mxu0 %v462
        %512 = vmatpush1.msra.mxu0 %v461
        %513 = vmatprep.subr.mxu0 %v459
        %514 = vmatpush1.msra.mxu0 %v458
        %515 = vmatprep.subr.mxu0 %v456
        %516 = vmatpush1.msra.mxu0 %v455
        %517 = vmatprep.subr.mxu0 %v453
        %518 = vmatpush1.msra.mxu0 %v452
        %519 = vmatprep.subr.mxu0 %v450
        %520 = vmatpush1.msra.mxu0 %v449
        %521 = vmatprep.subr.mxu0 %v447
        %522 = vmatpush1.msra.mxu0 %v446
        %523 = vmatprep.subr.mxu0 %v444
        %524 = vmatpush1.msra.mxu0 %v443
        %525 = vmatprep.subr.mxu0 %v441
        %526 = vmatpush1.msra.mxu0 %v440
        %527 = vmatprep.subr.mxu0 %v438
        %528 = vmatpush1.msra.mxu0 %v437
        %529 = vmatprep.subr.mxu0 %v435
        %530 = vmatpush1.msra.mxu0 %v434
        %531 = vmatprep.subr.mxu0 0.0
        %532 = vmatpush2.msra.mxu0 0.0
        %533 = vmatprep.subr.mxu0 0.0
        %534 = vmatpush2.msra.mxu0 0.0
        %535 = vmatprep.subr.mxu0 0.0
        %536 = vmatpush2.msra.mxu0 0.0
        %537 = vmatprep.subr.mxu0 0.0
        %538 = vmatpush2.msra.mxu0 0.0
        %539 = vmatprep.subr.mxu0 0.0
        %540 = vmatpush2.msra.mxu0 0.0
        %541 = vmatprep.subr.mxu0 0.0
        %542 = vmatpush2.msra.mxu0 0.0
        %543 = vmatprep.subr.mxu0 0.0
        %544 = vmatpush2.msra.mxu0 0.0
        %545 = vmatprep.subr.mxu0 0.0
        %546 = vmatpush2.msra.mxu0 0.0
        %547 = vmatprep.subr.mxu0 0.0
        %548 = vmatpush2.msra.mxu0 0.0
        %549 = vmatprep.subr.mxu0 0.0
        %550 = vmatpush2.msra.mxu0 0.0
        %551 = vmatprep.subr.mxu0 0.0
        %552 = vmatpush2.msra.mxu0 0.0
        %553 = vmatprep.subr.mxu0 0.0
        %554 = vmatpush2.msra.mxu0 0.0
        %555 = vmatprep.subr.mxu0 0.0
        %556 = vmatpush2.msra.mxu0 0.0
        %557 = vmatprep.subr.mxu0 0.0
        %558 = vmatpush2.msra.mxu0 0.0
        %559 = vmatprep.subr.mxu0 0.0
        %560 = vmatpush2.msra.mxu0 0.0
        %561 = vmatprep.subr.mxu0 0.0
        %562 = vmatpush2.msra.mxu0 0.0
        %563 = vmatprep.mubr.f32.mxu0 0.0
        %564 = vmatmul.mubr.f32.gmra.mxu0 %v430
        %v565 = vpop.f32.mrf.mxu0
        %v566 = vadd.f32 %v487, %v565
        %v567 = vpop.f32.mrf.mxu0
        %v568 = vadd.f32 %v491, %v567
        %569 = vdwg.mxu0
        %570 = vmatprep.subr.mxu0 0.0
        %571 = vmatpush1.msra.mxu0 %v481
        %572 = vmatprep.subr.mxu0 0.0
        %573 = vmatpush1.msra.mxu0 %v478
        %574 = vmatprep.subr.mxu0 0.0
        %575 = vmatpush1.msra.mxu0 %v475
        %576 = vmatprep.subr.mxu0 0.0
        %577 = vmatpush1.msra.mxu0 %v472
        %578 = vmatprep.subr.mxu0 0.0
        %579 = vmatpush1.msra.mxu0 %v469
        %580 = vmatprep.subr.mxu0 0.0
        %581 = vmatpush1.msra.mxu0 %v466
        %582 = vmatprep.subr.mxu0 0.0
        %583 = vmatpush1.msra.mxu0 %v463
        %584 = vmatprep.subr.mxu0 0.0
        %585 = vmatpush1.msra.mxu0 %v460
        %586 = vmatprep.subr.mxu0 0.0
        %587 = vmatpush1.msra.mxu0 %v457
        %588 = vmatprep.subr.mxu0 0.0
        %589 = vmatpush1.msra.mxu0 %v454
        %590 = vmatprep.subr.mxu0 0.0
        %591 = vmatpush1.msra.mxu0 %v451
        %592 = vmatprep.subr.mxu0 0.0
        %593 = vmatpush1.msra.mxu0 %v448
        %594 = vmatprep.subr.mxu0 0.0
        %595 = vmatpush1.msra.mxu0 %v445
        %596 = vmatprep.subr.mxu0 0.0
        %597 = vmatpush1.msra.mxu0 %v442
        %598 = vmatprep.subr.mxu0 0.0
        %599 = vmatpush1.msra.mxu0 %v439
        %600 = vmatprep.subr.mxu0 0.0
        %601 = vmatpush1.msra.mxu0 %v436
        %602 = vmatprep.subr.mxu0 0.0
        %603 = vmatpush2.msra.mxu0 0.0
        %604 = vmatprep.subr.mxu0 0.0
        %605 = vmatpush2.msra.mxu0 0.0
        %606 = vmatprep.subr.mxu0 0.0
        %607 = vmatpush2.msra.mxu0 0.0
        %608 = vmatprep.subr.mxu0 0.0
        %609 = vmatpush2.msra.mxu0 0.0
        %610 = vmatprep.subr.mxu0 0.0
        %611 = vmatpush2.msra.mxu0 0.0
        %612 = vmatprep.subr.mxu0 0.0
        %613 = vmatpush2.msra.mxu0 0.0
        %614 = vmatprep.subr.mxu0 0.0
        %615 = vmatpush2.msra.mxu0 0.0
        %616 = vmatprep.subr.mxu0 0.0
        %617 = vmatpush2.msra.mxu0 0.0
        %618 = vmatprep.subr.mxu0 0.0
        %619 = vmatpush2.msra.mxu0 0.0
        %620 = vmatprep.subr.mxu0 0.0
        %621 = vmatpush2.msra.mxu0 0.0
        %622 = vmatprep.subr.mxu0 0.0
        %623 = vmatpush2.msra.mxu0 0.0
        %624 = vmatprep.subr.mxu0 0.0
        %625 = vmatpush2.msra.mxu0 0.0
        %626 = vmatprep.subr.mxu0 0.0
        %627 = vmatpush2.msra.mxu0 0.0
        %628 = vmatprep.subr.mxu0 0.0
        %629 = vmatpush2.msra.mxu0 0.0
        %630 = vmatprep.subr.mxu0 0.0
        %631 = vmatpush2.msra.mxu0 0.0
        %632 = vmatprep.subr.mxu0 0.0
        %633 = vmatpush2.msra.mxu0 0.0
        %634 = vmatprep.mubr.f32.mxu0 0.0
        %635 = vmatmul.mubr.f32.gmra.mxu0 %v430
        %v636 = vpop.f32.mrf.mxu0
        %v637 = vadd.f32 %v495, %v636
        %v638 = vpop.f32.mrf.mxu0
        %639 = vdwg.mxu0
        %v640 = vadd.f32 %v431, %v566
        %v641 = vxor.u32 %v640, 2147483648
        %v642 = vmul.f32 %v641, 1.442695
        %v643 = vpow.pop %v642
        %v644 = vadd.f32 %v643, 1.0
        %v645 = vrcp.pop %v644
        %v646 = vmul.f32 1.0, %v645
        %v647 = vadd.f32 %v432, %v568
        %v648 = vxor.u32 %v647, 2147483648
        %v649 = vmul.f32 %v648, 1.442695
        %v650 = vpow.pop %v649
        %v651 = vadd.f32 %v650, 1.0
        %v652 = vrcp.pop %v651
        %v653 = vmul.f32 1.0, %v652
        %v654 = vmul.f32 %v646, %v637
        %v655 = vadd.f32 %v433, %v654
        %v656 = vtanh.pop %v655
        %v657 = vsub.f32 1.0, %v653
        %v658 = vmul.f32 %v657, %v656
        %v659 = vmul.f32 %v653, %v430
        %v660 = vadd.f32 %v658, %v659
        %s661 = smul.u32 %s21, 8
        %s662 = scalar_lea.vmem [#allocation7], %s661
        %663 = vst [vmem:[%s662] sm:$0xff] %v660
        // Predicated region
        $region53: #{tpu_custom_call.1} parent=39 // pred_check
          %p664 = pneg %p154
        $region54: #{tpu_custom_call.1} parent=39 // pred_check_branch
          %666 = sbr.rel (%p664) target = $region56
        $region55: #{tpu_custom_call.1} parent=39 // pred_region
          %s668 = ssub.s32 2048, 2048
          %669 = vsyncadd [#allocation4], %s668
          %s670 = sshll.u32 [#allocation7], 4
          %s671 = int_to_ptr.vmem [resolvable:$true] %s670
          %676 = dma.vmem_to_hbm [thread:$0]  %s671, 2048, %s5, [#allocation4], 128, 128, 8
        $region56: #{tpu_custom_call.1} parent=39 // pred_fallthru
          _
        // Predicated region
        $region57: #{tpu_custom_call.1} parent=39 // pred_check
          %p677 = pneg %p154
        $region58: #{tpu_custom_call.1} parent=39 // pred_check_branch
          %679 = sbr.rel (%p677) target = $region60
        $region59: #{tpu_custom_call.1} parent=39 // pred_region
          %680 = dma.done [#allocation4], 2048
        $region60: #{tpu_custom_call.1} parent=39 // pred_fallthru
          _
      $region40: #{tpu_custom_call.1} parent=5 // pred_fallthru
        _
      %p681 = scmp.le.s32.totalorder 2, %s16
      // Predicated region
      $region61: #{tpu_custom_call.1} parent=5 // pred_check
        %p682 = pneg %p681
      $region62: #{tpu_custom_call.1} parent=5 // pred_check_branch
        %684 = sbr.rel (%p682) target = $region64
      $region63: #{tpu_custom_call.1} parent=5 // pred_region
        %s685 = ssub.s32 %s16, 2
      $region64: #{tpu_custom_call.1} parent=5 // pred_fallthru
        _
    $region6: #{tpu_custom_call.1} parent=1 // loop_footer
      %s20 = sadd.s32 1, %s16
    $region7: #{tpu_custom_call.1} parent=1 // loop_footer_branch
      %15 = sbr.rel target = $region3
    $region8: #{tpu_custom_call.1} parent=1 // loop_exit
      _
    %686 = vsyncpa [#allocation3], 1
    %s687 = scalar_lea.sflag [#allocation3], 1
    %688 = vsyncpa %s687, 1
    %689 = vsyncpa [#allocation6], 1
    %690 = vsyncpa [#allocation4], 1
    %s691 = scalar_lea.sflag [#allocation4], 1
    %692 = vsyncpa %s691, 1

</llo_original>
